<compile_context>
chip_gen: v7x
topology: tpu7x:2x2x1
jax: 0.10.0
libtpu: 0.0.40
codegen_flags: <defaults>
</compile_context>

<pallas_src>
import functools

import jax
import jax.numpy as jnp
from jax.experimental import pallas as pl
from jax.experimental.pallas import tpu as pltpu


# ----------------------------------------------------------------------------
# Fused kernel: GCN layer + (MLP head with folded final linear), per batch.
# ----------------------------------------------------------------------------
def fused_kernel(x_ref, adjk_ref, wg_ref, bg_ref, w1_ref, b1_ref,
                 w23_ref, b23_ref, o_ref):
    # x_ref:    (1, N, D)   bf16     adjk_ref: (1, Nk, N) bf16 (kept rows only)
    # wg_ref:   (D, D)      bf16     bg_ref:   (1, D)     f32
    # w1_ref:   (D, H)      bf16     b1_ref:   (1, H)     f32
    # w23_ref:  (H, 1)      f32      b23_ref:  (1, 1)     f32
    # o_ref:    (1, Nk, 1)  f32
    x = x_ref[0]                                              # (N, D) bf16
    adj_k = adjk_ref[0]                                       # (Nk, N) bf16

    # --- synthetic graph encoder: relu(adj @ (x @ Wg) + bg) ---
    xw = jnp.dot(x, wg_ref[...],
                 preferred_element_type=jnp.float32)          # (N, D) f32
    h = jnp.dot(adj_k, xw.astype(jnp.bfloat16),
                preferred_element_type=jnp.float32)           # (Nk, D) f32
    h = jnp.maximum(h + bg_ref[...], 0.0)                     # ReLU in f32

    # --- MLP layer 1: Linear(D, H) + LeakyReLU(0.01) (dropout = identity) ---
    z1 = jnp.dot(h.astype(jnp.bfloat16), w1_ref[...],
                 preferred_element_type=jnp.float32) + b1_ref[...]   # (Nk, H) f32
    a1 = jnp.where(z1 > 0, z1, 0.01 * z1)                     # LeakyReLU in f32

    # --- folded (MLP layer 2) @ final_layer: (Nk, H) @ (H, 1) + b23 ---
    out = jnp.dot(a1, w23_ref[...],
                  preferred_element_type=jnp.float32) + b23_ref[...]  # (Nk, 1)
    # TODO(synk): output is lane-width 1 (matches module's [..., 1] shape);
    # tiny output tensor, so masked stores here are negligible.
    o_ref[0] = out


def fused_forward_pallas(x_b, adj_b, wg_b, bg, w1_b, b1, w23, b23):
    B, N, D = x_b.shape
    Nk = adj_b.shape[1]
    H = w1_b.shape[1]
    return pl.pallas_call(
        fused_kernel,
        out_shape=jax.ShapeDtypeStruct((B, Nk, 1), jnp.float32),
        grid_spec=pl.GridSpec(
            grid=(B,),
            in_specs=[
                pl.BlockSpec((1, N, D), lambda b: (b, 0, 0)),    # x (bf16)
                pl.BlockSpec((1, Nk, N), lambda b: (b, 0, 0)),   # adj kept rows (bf16)
                pl.BlockSpec((D, D), lambda b: (0, 0)),          # wg (resident)
                pl.BlockSpec((1, D), lambda b: (0, 0)),          # bg
                pl.BlockSpec((D, H), lambda b: (0, 0)),          # w1 (resident)
                pl.BlockSpec((1, H), lambda b: (0, 0)),          # b1
                pl.BlockSpec((H, 1), lambda b: (0, 0)),          # folded w23
                pl.BlockSpec((1, 1), lambda b: (0, 0)),          # folded b23
            ],
            out_specs=pl.BlockSpec((1, Nk, 1), lambda b: (b, 0, 0)),
        ),
        compiler_params=pltpu.CompilerParams(
            dimension_semantics=("parallel",),
        ),
    )(x_b, adj_b, wg_b, bg, w1_b, b1, w23, b23)


# ----------------------------------------------------------------------------
# Full forward pass (glue in plain JAX: casts, node slicing, weight folding).
# ----------------------------------------------------------------------------
@functools.partial(jax.jit, static_argnames=("docnum", "secnum"))
def end2end_encoder_forward(params, x, adj, docnum, secnum):
    x = x.astype(jnp.float32)
    adj = adj.astype(jnp.float32)

    B, N, D = x.shape
    n_drop = docnum + secnum + 1
    Nk = N - n_drop

    # Slice adjacency ROWS for the kept nodes only: dropped node rows of the
    # GCN output are never consumed downstream, so neither their adj rows nor
    # their FLOPs are needed.  (All N columns are still needed for the
    # aggregation over neighbours.)
    adj_k = adj[:, :Nk, :]

    # bf16 for the HBM-dominant matmul operands (f32 accumulation in-kernel).
    x_b = x.astype(jnp.bfloat16)
    adj_b = adj_k.astype(jnp.bfloat16)
    wg_b = params["wg"].astype(jnp.bfloat16)
    w1_b = params["w1"].astype(jnp.bfloat16)

    # Fold final Linear(in_dim, 1) into the second MLP linear (exact: no
    # nonlinearity between them).
    w23 = params["w2"] @ params["w3"]                    # (H, 1)
    b23 = params["b2"] @ params["w3"] + params["b3"]     # (1, 1)

    # TODO(synk): for large N, tile the adj row/contraction dims with an
    # accumulator (grid=(B, Nk//tm, N//tk)) to stay inside v7x's 64 MiB /
    # v5e's 16 MiB scoped VMEM; untiled blocks are fine at these shapes.
    out = fused_forward_pallas(
        x_b, adj_b, wg_b, params["bg"], w1_b, params["b1"], w23, b23
    )
    return out  # (B, Nk, 1)


def init_params(key, in_dim, hidden_dim):
    ks = jax.random.split(key, 4)
    scale = 0.1
    return {
        # synthetic graph encoder (GCN layer)
        "wg": scale * jax.random.normal(ks[0], (in_dim, in_dim), jnp.float32),
        "bg": jnp.zeros((1, in_dim), jnp.float32),
        # MLP: in_dim -> hidden -> in_dim
        "w1": scale * jax.random.normal(ks[1], (in_dim, hidden_dim), jnp.float32),
        "b1": jnp.zeros((1, hidden_dim), jnp.float32),
        "w2": scale * jax.random.normal(ks[2], (hidden_dim, in_dim), jnp.float32),
        "b2": jnp.zeros((1, in_dim), jnp.float32),
        # final layer: in_dim -> 1
        "w3": scale * jax.random.normal(ks[3], (in_dim, 1), jnp.float32),
        "b3": jnp.zeros((1, 1), jnp.float32),
    }


if __name__ == "__main__":
    key = jax.random.PRNGKey(0)
    kx, kadj, kp = jax.random.split(key, 3)

    B, N, in_dim, hidden_dim = 2, 16, 32, 32
    docnum, secnum = 2, 3           # slice drops docnum + secnum + 1 = 6 nodes

    x = jax.random.normal(kx, (B, N, in_dim), jnp.float32)
    adj = (jax.random.uniform(kadj, (B, N, N)) > 0.5).astype(jnp.float32)

    params = init_params(kp, in_dim, hidden_dim)

    out = end2end_encoder_forward(params, x, adj, docnum, secnum)
    out = jax.block_until_ready(out)

    expected_shape = (B, N - docnum - secnum - 1, 1)
    assert out.shape == expected_shape, (out.shape, expected_shape)
    assert bool(jnp.all(jnp.isfinite(out)))

    print("KERNEL_OK")
</pallas_src>

<mosaic_0001>
module attributes {stable_mosaic.version = 11 : i64} {
  func.func @fused_kernel(%arg0: i32, %arg1: memref<1x16x32xbf16, #tpu.memory_space<vmem>>, %arg2: memref<1x10x16xbf16, #tpu.memory_space<vmem>>, %arg3: memref<32x32xbf16, #tpu.memory_space<vmem>>, %arg4: memref<1x32xf32, #tpu.memory_space<vmem>>, %arg5: memref<32x32xbf16, #tpu.memory_space<vmem>>, %arg6: memref<1x32xf32, #tpu.memory_space<vmem>>, %arg7: memref<32x1xf32, #tpu.memory_space<vmem>>, %arg8: memref<1x1xf32, #tpu.memory_space<vmem>>, %arg9: memref<1x10x1xf32, #tpu.memory_space<vmem>>) attributes {dimension_semantics = [#tpu.dimension_semantics<parallel>], iteration_bounds = array<i64: 2>, scalar_prefetch = 0 : i64, scratch_operands = 0 : i64, tpu.core_type = #tpu.core_type<tc>, window_params = [{transform_indices = @transform_0, window_bounds = array<i64: 1, 16, 32>}, {transform_indices = @transform_1, window_bounds = array<i64: 1, 10, 16>}, {pipeline_mode = #tpu.pipeline_mode<synchronous>, transform_indices = @transform_2, window_bounds = array<i64: 32, 32>}, {pipeline_mode = #tpu.pipeline_mode<synchronous>, transform_indices = @transform_3, window_bounds = array<i64: 1, 32>}, {pipeline_mode = #tpu.pipeline_mode<synchronous>, transform_indices = @transform_4, window_bounds = array<i64: 32, 32>}, {pipeline_mode = #tpu.pipeline_mode<synchronous>, transform_indices = @transform_5, window_bounds = array<i64: 1, 32>}, {pipeline_mode = #tpu.pipeline_mode<synchronous>, transform_indices = @transform_6, window_bounds = array<i64: 32, 1>}, {pipeline_mode = #tpu.pipeline_mode<synchronous>, transform_indices = @transform_7, window_bounds = array<i64: 1, 1>}, {transform_indices = @transform_8, window_bounds = array<i64: 1, 10, 1>}]} {
    %c0 = arith.constant 0 : index
    %c0_0 = arith.constant 0 : index
    %c0_1 = arith.constant 0 : index
    %0 = vector.load %arg1[%c0, %c0_0, %c0_1] : memref<1x16x32xbf16, #tpu.memory_space<vmem>>, vector<1x16x32xbf16>
    %1 = vector.shape_cast %0 : vector<1x16x32xbf16> to vector<16x32xbf16>
    %c0_2 = arith.constant 0 : index
    %c0_3 = arith.constant 0 : index
    %c0_4 = arith.constant 0 : index
    %2 = vector.load %arg2[%c0_2, %c0_3, %c0_4] : memref<1x10x16xbf16, #tpu.memory_space<vmem>>, vector<1x10x16xbf16>
    %3 = vector.shape_cast %2 : vector<1x10x16xbf16> to vector<10x16xbf16>
    %c0_5 = arith.constant 0 : index
    %c0_6 = arith.constant 0 : index
    %4 = vector.load %arg3[%c0_5, %c0_6] : memref<32x32xbf16, #tpu.memory_space<vmem>>, vector<32x32xbf16>
    %cst = arith.constant dense<0.000000e+00> : vector<16x32xf32>
    %5 = tpu.matmul %1, %4, %cst {dimension_numbers = #tpu.dot_dimension_numbers<[1], [0], [0], [1], [0, 0, 1, 1], [], []>} : vector<16x32xbf16>, vector<32x32xbf16>, vector<16x32xf32> -> vector<16x32xf32>
    %6 = arith.truncf %5 : vector<16x32xf32> to vector<16x32xbf16>
    %cst_7 = arith.constant dense<0.000000e+00> : vector<10x32xf32>
    %7 = tpu.matmul %3, %6, %cst_7 {dimension_numbers = #tpu.dot_dimension_numbers<[1], [0], [0], [1], [0, 0, 1, 1], [], []>} : vector<10x16xbf16>, vector<16x32xbf16>, vector<10x32xf32> -> vector<10x32xf32>
    %c0_8 = arith.constant 0 : index
    %c0_9 = arith.constant 0 : index
    %8 = vector.load %arg4[%c0_8, %c0_9] : memref<1x32xf32, #tpu.memory_space<vmem>>, vector<1x32xf32>
    %9 = vector.broadcast %8 : vector<1x32xf32> to vector<10x32xf32>
    %10 = arith.addf %7, %9 : vector<10x32xf32>
    %cst_10 = arith.constant 0.000000e+00 : f32
    %11 = vector.broadcast %cst_10 : f32 to vector<10x32xf32>
    %12 = arith.maximumf %10, %11 : vector<10x32xf32>
    %13 = arith.truncf %12 : vector<10x32xf32> to vector<10x32xbf16>
    %c0_11 = arith.constant 0 : index
    %c0_12 = arith.constant 0 : index
    %14 = vector.load %arg5[%c0_11, %c0_12] : memref<32x32xbf16, #tpu.memory_space<vmem>>, vector<32x32xbf16>
    %cst_13 = arith.constant dense<0.000000e+00> : vector<10x32xf32>
    %15 = tpu.matmul %13, %14, %cst_13 {dimension_numbers = #tpu.dot_dimension_numbers<[1], [0], [0], [1], [0, 0, 1, 1], [], []>} : vector<10x32xbf16>, vector<32x32xbf16>, vector<10x32xf32> -> vector<10x32xf32>
    %c0_14 = arith.constant 0 : index
    %c0_15 = arith.constant 0 : index
    %16 = vector.load %arg6[%c0_14, %c0_15] : memref<1x32xf32, #tpu.memory_space<vmem>>, vector<1x32xf32>
    %17 = vector.broadcast %16 : vector<1x32xf32> to vector<10x32xf32>
    %18 = arith.addf %15, %17 : vector<10x32xf32>
    %cst_16 = arith.constant 0.000000e+00 : f32
    %19 = vector.broadcast %cst_16 : f32 to vector<10x32xf32>
    %20 = arith.cmpf ogt, %18, %19 : vector<10x32xf32>
    %cst_17 = arith.constant 0.00999999977 : f32
    %21 = vector.broadcast %cst_17 : f32 to vector<10x32xf32>
    %22 = arith.mulf %21, %18 : vector<10x32xf32>
    %23 = arith.select %20, %18, %22 : vector<10x32xi1>, vector<10x32xf32>
    %c0_18 = arith.constant 0 : index
    %c0_19 = arith.constant 0 : index
    %24 = vector.load %arg7[%c0_18, %c0_19] : memref<32x1xf32, #tpu.memory_space<vmem>>, vector<32x1xf32>
    %cst_20 = arith.constant dense<0.000000e+00> : vector<10x1xf32>
    %25 = tpu.matmul %23, %24, %cst_20 {dimension_numbers = #tpu.dot_dimension_numbers<[1], [0], [0], [1], [0, 0, 1, 1], [], []>} : vector<10x32xf32>, vector<32x1xf32>, vector<10x1xf32> -> vector<10x1xf32>
    %c0_21 = arith.constant 0 : index
    %c0_22 = arith.constant 0 : index
    %26 = vector.load %arg8[%c0_21, %c0_22] : memref<1x1xf32, #tpu.memory_space<vmem>>, vector<1x1xf32>
    %27 = vector.broadcast %26 : vector<1x1xf32> to vector<10x1xf32>
    %28 = arith.addf %25, %27 : vector<10x1xf32>
    %c0_23 = arith.constant 0 : index
    %c0_24 = arith.constant 0 : index
    %c0_25 = arith.constant 0 : index
    %29 = vector.load %arg9[%c0_23, %c0_24, %c0_25] : memref<1x10x1xf32, #tpu.memory_space<vmem>>, vector<1x10x1xf32>
    %30 = vector.shape_cast %29 : vector<1x10x1xf32> to vector<10x1xf32>
    %31 = vector.shape_cast %28 : vector<10x1xf32> to vector<1x10x1xf32>
    tpu.vector_store %arg9[%c0_23, %c0_24, %c0_25], %31 {strides = array<i32>} : memref<1x10x1xf32, #tpu.memory_space<vmem>>, vector<1x10x1xf32>,
    return
  }
  func.func @transform_0(%arg0: i32) -> (i32, i32, i32) {
    %c0_i32 = arith.constant 0 : i32
    %c0_i32_0 = arith.constant 0 : i32
    %c0_i32_1 = arith.constant 0 : i32
    return %arg0, %c0_i32, %c0_i32_0 : i32, i32, i32
  }
  func.func @transform_1(%arg0: i32) -> (i32, i32, i32) {
    %c0_i32 = arith.constant 0 : i32
    %c0_i32_0 = arith.constant 0 : i32
    %c0_i32_1 = arith.constant 0 : i32
    return %arg0, %c0_i32, %c0_i32_0 : i32, i32, i32
  }
  func.func @transform_2(%arg0: i32) -> (i32, i32) {
    %c0_i32 = arith.constant 0 : i32
    %c0_i32_0 = arith.constant 0 : i32
    %c0_i32_1 = arith.constant 0 : i32
    return %c0_i32, %c0_i32_0 : i32, i32
  }
  func.func @transform_3(%arg0: i32) -> (i32, i32) {
    %c0_i32 = arith.constant 0 : i32
    %c0_i32_0 = arith.constant 0 : i32
    %c0_i32_1 = arith.constant 0 : i32
    return %c0_i32, %c0_i32_0 : i32, i32
  }
  func.func @transform_4(%arg0: i32) -> (i32, i32) {
    %c0_i32 = arith.constant 0 : i32
    %c0_i32_0 = arith.constant 0 : i32
    %c0_i32_1 = arith.constant 0 : i32
    return %c0_i32, %c0_i32_0 : i32, i32
  }
  func.func @transform_5(%arg0: i32) -> (i32, i32) {
    %c0_i32 = arith.constant 0 : i32
    %c0_i32_0 = arith.constant 0 : i32
    %c0_i32_1 = arith.constant 0 : i32
    return %c0_i32, %c0_i32_0 : i32, i32
  }
  func.func @transform_6(%arg0: i32) -> (i32, i32) {
    %c0_i32 = arith.constant 0 : i32
    %c0_i32_0 = arith.constant 0 : i32
    %c0_i32_1 = arith.constant 0 : i32
    return %c0_i32, %c0_i32_0 : i32, i32
  }
  func.func @transform_7(%arg0: i32) -> (i32, i32) {
    %c0_i32 = arith.constant 0 : i32
    %c0_i32_0 = arith.constant 0 : i32
    %c0_i32_1 = arith.constant 0 : i32
    return %c0_i32, %c0_i32_0 : i32, i32
  }
  func.func @transform_8(%arg0: i32) -> (i32, i32, i32) {
    %c0_i32 = arith.constant 0 : i32
    %c0_i32_0 = arith.constant 0 : i32
    %c0_i32_1 = arith.constant 0 : i32
    return %arg0, %c0_i32, %c0_i32_0 : i32, i32, i32
  }
}

</mosaic_0001>

<llo_original>
// kernel: end2end_encoder_forward.1
$region0: #{end2end_encoder_forward.1}
  #allocation0 [shape = 'u32[]', space=smem, size = 0x4, offset = 0x4, fixed_abs, tag = 'smem constant byte address 0x4 - core index']
  #allocation1 [shape = 'u32[144,128]{1,0:T(1,128)}', space=vmem, size = 0x12000, scoped, tag = 'internal scratch']
  #allocation2 [shape = 'f32[1,1]{1,0:T(1,128)S(1)}', space=vmem, size = 0x200, scoped, tag = 'scoped memory for end2end_encoder_forward.1']
  %s0 = inlined_call_operand.vmem [shape: bf16[2,16,32], index: 0, kind: input, shape index: {}]
  %s1 = inlined_call_operand.vmem [shape: bf16[2,10,16], index: 1, kind: input, shape index: {}]
  %s2 = inlined_call_operand.vmem [shape: bf16[32,32], index: 2, kind: input, shape index: {}]
  %s3 = inlined_call_operand.vmem [shape: f32[1,32], index: 3, kind: input, shape index: {}]
  %s4 = inlined_call_operand.vmem [shape: bf16[32,32], index: 4, kind: input, shape index: {}]
  %s5 = inlined_call_operand.vmem [shape: f32[1,32], index: 5, kind: input, shape index: {}]
  %s6 = inlined_call_operand.vmem [shape: f32[32,1], index: 6, kind: input, shape index: {}]
  %s7 = inlined_call_operand.<no memory space> [shape: f32[1,1], index: 7, kind: input, shape index: {}]
  %s8 = inlined_call_operand.vmem [shape: f32[2,10,1], index: 8, kind: output, shape index: {}]
  %s9 = sld [smem:[#allocation0]]
  $region65: #{end2end_encoder_forward.1} parent=0
    _
  %s11 = ssub.s32 1, %s9
  %s12 = scalar_select 0, %s11, %s9
  %v13 = vstv %s7
  %14 = vst [vmem:[#allocation2] sm:$0x1] %v13
  loop: start=0, step=1, limit=4
  $region2: #{end2end_encoder_forward.1} parent=0 // loop_pre_header
    _
  $region3: #{end2end_encoder_forward.1} parent=0 // loop_header
    %s16 = sphi 0, %s20
    %p17 = scmp.ge.s32.totalorder %s16, 4
    %s26 = sphi 0, %s28
    %s29 = sphi 0, %s26
    %s30 = sphi 0, %s29
    %s46 = sphi 0, %s30
    %s52 = sphi 0, %s54
    %s55 = sphi 0, %s52
    %s56 = sphi 0, %s55
    %s72 = sphi 0, %s56
    %s76 = sphi 0, %s76
    %s78 = sphi 0, %s76
    %s79 = sphi 0, %s78
    %s93 = sphi 0, %s79
    %s97 = sphi 0, %s97
    %s99 = sphi 0, %s97
    %s100 = sphi 0, %s99
    %s114 = sphi 0, %s100
    %s118 = sphi 0, %s118
    %s120 = sphi 0, %s118
    %s121 = sphi 0, %s120
    %s135 = sphi 0, %s121
    %s139 = sphi 0, %s139
    %s141 = sphi 0, %s139
    %s142 = sphi 0, %s141
    %s156 = sphi 0, %s142
    %s160 = sphi 0, %s160
    %s162 = sphi 0, %s160
    %s163 = sphi 0, %s162
    %s177 = sphi 0, %s163
    %s181 = sphi 0, %s181
    %s183 = sphi 0, %s181
    %s184 = sphi 0, %s183
    %s198 = sphi 0, %s184
    %s204 = sphi 0, %s206
    %s207 = sphi 0, %s204
    %s208 = sphi 0, %s207
    %s224 = sphi 0, %s208
  $region4: #{end2end_encoder_forward.1} parent=0 // loop_header_branch
    %19 = sbr.rel (%p17) target = $region8
  $region5: #{end2end_encoder_forward.1} parent=0 // loop_body
    %s21 = ssub.s32 %s16, 1
    %s22 = ssub.s32 %s16, 2
    %s23 = sadd.s32 %s16, 1
    %s24 = ssub.s32 %s16, %s23
    %p25 = scmp.eq.s32.totalorder %s24, 0
    %s27 = sadd.s32 %s26, 1
    %s28 = scalar_select %p25, %s26, %s27
    %p31 = pneg %p25
    %p32 = scmp.eq.s32.totalorder %s16, 1
    %p33 = por %p31, %p32
    %p34 = scmp.ne.s32.totalorder %s26, %s29
    %p35 = scmp.eq.s32.totalorder %s16, 0
    %p36 = por %p34, %p35
    %p37 = scmp.ne.s32.totalorder %s26, %s29
    %p38 = scmp.eq.s32.totalorder %s21, 1
    %p39 = por %p37, %p38
    %p40 = scmp.ne.s32.totalorder %s29, %s30
    %p41 = scmp.eq.s32.totalorder %s21, 0
    %p42 = por %p40, %p41
    %p43 = scmp.ne.s32.totalorder %s29, %s30
    %p44 = scmp.eq.s32.totalorder %s22, 1
    %p45 = por %p43, %p44
    %p47 = scmp.ne.s32.totalorder %s30, %s46
    %p48 = scmp.eq.s32.totalorder %s22, 0
    %p49 = por %p47, %p48
    %s50 = ssub.s32 %s16, %s23
    %p51 = scmp.eq.s32.totalorder %s50, 0
    %s53 = sadd.s32 %s52, 1
    %s54 = scalar_select %p51, %s52, %s53
    %p57 = pneg %p51
    %p58 = scmp.eq.s32.totalorder %s16, 1
    %p59 = por %p57, %p58
    %p60 = scmp.ne.s32.totalorder %s52, %s55
    %p61 = scmp.eq.s32.totalorder %s16, 0
    %p62 = por %p60, %p61
    %p63 = scmp.ne.s32.totalorder %s52, %s55
    %p64 = scmp.eq.s32.totalorder %s21, 1
    %p65 = por %p63, %p64
    %p66 = scmp.ne.s32.totalorder %s55, %s56
    %p67 = scmp.eq.s32.totalorder %s21, 0
    %p68 = por %p66, %p67
    %p69 = scmp.ne.s32.totalorder %s55, %s56
    %p70 = scmp.eq.s32.totalorder %s22, 1
    %p71 = por %p69, %p70
    %p73 = scmp.ne.s32.totalorder %s56, %s72
    %p74 = scmp.eq.s32.totalorder %s22, 0
    %p75 = por %p73, %p74
    %s77 = sadd.s32 %s76, 1
    %p80 = scmp.eq.s32.totalorder %s16, 1
    %p81 = scmp.ne.s32.totalorder %s76, %s78
    %p82 = scmp.eq.s32.totalorder %s16, 0
    %p83 = por %p81, %p82
    %p84 = scmp.ne.s32.totalorder %s76, %s78
    %p85 = scmp.eq.s32.totalorder %s21, 1
    %p86 = por %p84, %p85
    %p87 = scmp.ne.s32.totalorder %s78, %s79
    %p88 = scmp.eq.s32.totalorder %s21, 0
    %p89 = por %p87, %p88
    %p90 = scmp.ne.s32.totalorder %s78, %s79
    %p91 = scmp.eq.s32.totalorder %s22, 1
    %p92 = por %p90, %p91
    %p94 = scmp.ne.s32.totalorder %s79, %s93
    %p95 = scmp.eq.s32.totalorder %s22, 0
    %p96 = por %p94, %p95
    %s98 = sadd.s32 %s97, 1
    %p101 = scmp.eq.s32.totalorder %s16, 1
    %p102 = scmp.ne.s32.totalorder %s97, %s99
    %p103 = scmp.eq.s32.totalorder %s16, 0
    %p104 = por %p102, %p103
    %p105 = scmp.ne.s32.totalorder %s97, %s99
    %p106 = scmp.eq.s32.totalorder %s21, 1
    %p107 = por %p105, %p106
    %p108 = scmp.ne.s32.totalorder %s99, %s100
    %p109 = scmp.eq.s32.totalorder %s21, 0
    %p110 = por %p108, %p109
    %p111 = scmp.ne.s32.totalorder %s99, %s100
    %p112 = scmp.eq.s32.totalorder %s22, 1
    %p113 = por %p111, %p112
    %p115 = scmp.ne.s32.totalorder %s100, %s114
    %p116 = scmp.eq.s32.totalorder %s22, 0
    %p117 = por %p115, %p116
    %s119 = sadd.s32 %s118, 1
    %p122 = scmp.eq.s32.totalorder %s16, 1
    %p123 = scmp.ne.s32.totalorder %s118, %s120
    %p124 = scmp.eq.s32.totalorder %s16, 0
    %p125 = por %p123, %p124
    %p126 = scmp.ne.s32.totalorder %s118, %s120
    %p127 = scmp.eq.s32.totalorder %s21, 1
    %p128 = por %p126, %p127
    %p129 = scmp.ne.s32.totalorder %s120, %s121
    %p130 = scmp.eq.s32.totalorder %s21, 0
    %p131 = por %p129, %p130
    %p132 = scmp.ne.s32.totalorder %s120, %s121
    %p133 = scmp.eq.s32.totalorder %s22, 1
    %p134 = por %p132, %p133
    %p136 = scmp.ne.s32.totalorder %s121, %s135
    %p137 = scmp.eq.s32.totalorder %s22, 0
    %p138 = por %p136, %p137
    %s140 = sadd.s32 %s139, 1
    %p143 = scmp.eq.s32.totalorder %s16, 1
    %p144 = scmp.ne.s32.totalorder %s139, %s141
    %p145 = scmp.eq.s32.totalorder %s16, 0
    %p146 = por %p144, %p145
    %p147 = scmp.ne.s32.totalorder %s139, %s141
    %p148 = scmp.eq.s32.totalorder %s21, 1
    %p149 = por %p147, %p148
    %p150 = scmp.ne.s32.totalorder %s141, %s142
    %p151 = scmp.eq.s32.totalorder %s21, 0
    %p152 = por %p150, %p151
    %p153 = scmp.ne.s32.totalorder %s141, %s142
    %p154 = scmp.eq.s32.totalorder %s22, 1
    %p155 = por %p153, %p154
    %p157 = scmp.ne.s32.totalorder %s142, %s156
    %p158 = scmp.eq.s32.totalorder %s22, 0
    %p159 = por %p157, %p158
    %s161 = sadd.s32 %s160, 1
    %p164 = scmp.eq.s32.totalorder %s16, 1
    %p165 = scmp.ne.s32.totalorder %s160, %s162
    %p166 = scmp.eq.s32.totalorder %s16, 0
    %p167 = por %p165, %p166
    %p168 = scmp.ne.s32.totalorder %s160, %s162
    %p169 = scmp.eq.s32.totalorder %s21, 1
    %p170 = por %p168, %p169
    %p171 = scmp.ne.s32.totalorder %s162, %s163
    %p172 = scmp.eq.s32.totalorder %s21, 0
    %p173 = por %p171, %p172
    %p174 = scmp.ne.s32.totalorder %s162, %s163
    %p175 = scmp.eq.s32.totalorder %s22, 1
    %p176 = por %p174, %p175
    %p178 = scmp.ne.s32.totalorder %s163, %s177
    %p179 = scmp.eq.s32.totalorder %s22, 0
    %p180 = por %p178, %p179
    %s182 = sadd.s32 %s181, 1
    %p185 = scmp.eq.s32.totalorder %s16, 1
    %p186 = scmp.ne.s32.totalorder %s181, %s183
    %p187 = scmp.eq.s32.totalorder %s16, 0
    %p188 = por %p186, %p187
    %p189 = scmp.ne.s32.totalorder %s181, %s183
    %p190 = scmp.eq.s32.totalorder %s21, 1
    %p191 = por %p189, %p190
    %p192 = scmp.ne.s32.totalorder %s183, %s184
    %p193 = scmp.eq.s32.totalorder %s21, 0
    %p194 = por %p192, %p193
    %p195 = scmp.ne.s32.totalorder %s183, %s184
    %p196 = scmp.eq.s32.totalorder %s22, 1
    %p197 = por %p195, %p196
    %p199 = scmp.ne.s32.totalorder %s184, %s198
    %p200 = scmp.eq.s32.totalorder %s22, 0
    %p201 = por %p199, %p200
    %s202 = ssub.s32 %s16, %s23
    %p203 = scmp.eq.s32.totalorder %s202, 0
    %s205 = sadd.s32 %s204, 1
    %s206 = scalar_select %p203, %s204, %s205
    %p209 = pneg %p203
    %p210 = scmp.eq.s32.totalorder %s16, 1
    %p211 = por %p209, %p210
    %p212 = scmp.ne.s32.totalorder %s204, %s207
    %p213 = scmp.eq.s32.totalorder %s16, 0
    %p214 = por %p212, %p213
    %p215 = scmp.ne.s32.totalorder %s204, %s207
    %p216 = scmp.eq.s32.totalorder %s21, 1
    %p217 = por %p215, %p216
    %p218 = scmp.ne.s32.totalorder %s207, %s208
    %p219 = scmp.eq.s32.totalorder %s21, 0
    %p220 = por %p218, %p219
    %p221 = scmp.ne.s32.totalorder %s207, %s208
    %p222 = scmp.eq.s32.totalorder %s22, 1
    %p223 = por %p221, %p222
    %p225 = scmp.ne.s32.totalorder %s208, %s224
    %p226 = scmp.eq.s32.totalorder %s22, 0
    %p227 = por %p225, %p226
    %p228 = scmp.le.s32.totalorder 1, %s16
    %p229 = scmp.lt.s32.totalorder %s16, 3
    %p230 = pnand %p228, %p229
    %p231 = pneg %p230
    // Predicated region
    $region9: #{end2end_encoder_forward.1} parent=5 // pred_check
      _
    $region10: #{end2end_encoder_forward.1} parent=5 // pred_check_branch
      %233 = sbr.rel (%p230) target = $region12
    $region11: #{end2end_encoder_forward.1} parent=5 // pred_region
      %s234 = ssub.s32 %s16, 1
      // Predicated region
      $region13: #{end2end_encoder_forward.1} parent=11 // pred_check
        %p235 = pneg %p89
      $region14: #{end2end_encoder_forward.1} parent=11 // pred_check_branch
        %237 = sbr.rel (%p235) target = $region16
      $region15: #{end2end_encoder_forward.1} parent=11 // pred_region
        _
      $region16: #{end2end_encoder_forward.1} parent=11 // pred_fallthru
        _
      // Predicated region
      $region17: #{end2end_encoder_forward.1} parent=11 // pred_check
        %p238 = pneg %p110
      $region18: #{end2end_encoder_forward.1} parent=11 // pred_check_branch
        %240 = sbr.rel (%p238) target = $region20
      $region19: #{end2end_encoder_forward.1} parent=11 // pred_region
        _
      $region20: #{end2end_encoder_forward.1} parent=11 // pred_fallthru
        _
      // Predicated region
      $region21: #{end2end_encoder_forward.1} parent=11 // pred_check
        %p241 = pneg %p131
      $region22: #{end2end_encoder_forward.1} parent=11 // pred_check_branch
        %243 = sbr.rel (%p241) target = $region24
      $region23: #{end2end_encoder_forward.1} parent=11 // pred_region
        _
      $region24: #{end2end_encoder_forward.1} parent=11 // pred_fallthru
        _
      // Predicated region
      $region25: #{end2end_encoder_forward.1} parent=11 // pred_check
        %p244 = pneg %p152
      $region26: #{end2end_encoder_forward.1} parent=11 // pred_check_branch
        %246 = sbr.rel (%p244) target = $region28
      $region27: #{end2end_encoder_forward.1} parent=11 // pred_region
        _
      $region28: #{end2end_encoder_forward.1} parent=11 // pred_fallthru
        _
      // Predicated region
      $region29: #{end2end_encoder_forward.1} parent=11 // pred_check
        %p247 = pneg %p173
      $region30: #{end2end_encoder_forward.1} parent=11 // pred_check_branch
        %249 = sbr.rel (%p247) target = $region32
      $region31: #{end2end_encoder_forward.1} parent=11 // pred_region
        _
      $region32: #{end2end_encoder_forward.1} parent=11 // pred_fallthru
        _
      // Predicated region
      $region33: #{end2end_encoder_forward.1} parent=11 // pred_check
        %p250 = pneg %p194
      $region34: #{end2end_encoder_forward.1} parent=11 // pred_check_branch
        %252 = sbr.rel (%p250) target = $region36
      $region35: #{end2end_encoder_forward.1} parent=11 // pred_region
        _
      $region36: #{end2end_encoder_forward.1} parent=11 // pred_fallthru
        _
    $region12: #{end2end_encoder_forward.1} parent=5 // pred_fallthru
      _
    %p253 = scmp.lt.s32.totalorder %s16, 2
    // Predicated region
    $region37: #{end2end_encoder_forward.1} parent=5 // pred_check
      %p254 = pneg %p253
    $region38: #{end2end_encoder_forward.1} parent=5 // pred_check_branch
      %256 = sbr.rel (%p254) target = $region40
    $region39: #{end2end_encoder_forward.1} parent=5 // pred_region
      // Predicated region
      $region41: #{end2end_encoder_forward.1} parent=39 // pred_check
        %p257 = pneg %p36
      $region42: #{end2end_encoder_forward.1} parent=39 // pred_check_branch
        %259 = sbr.rel (%p257) target = $region44
      $region43: #{end2end_encoder_forward.1} parent=39 // pred_region
        %p260 = scmp.lt.s32.totalorder %s16, 1
        %s261 = scalar_select %p260, %s16, 1
        %s262 = smul.addr %s261, 2
        %s263 = smul.addr %s262, 4
        %s264 = scalar_lea.vmem %s0, %s263
      $region44: #{end2end_encoder_forward.1} parent=39 // pred_fallthru
        _
      // Predicated region
      $region45: #{end2end_encoder_forward.1} parent=39 // pred_check
        %p265 = pneg %p62
      $region46: #{end2end_encoder_forward.1} parent=39 // pred_check_branch
        %267 = sbr.rel (%p265) target = $region48
      $region47: #{end2end_encoder_forward.1} parent=39 // pred_region
        %p268 = scmp.lt.s32.totalorder %s16, 1
        %s269 = scalar_select %p268, %s16, 1
        %s270 = smul.addr %s269, 2
        %s271 = smul.addr %s270, 4
        %s272 = scalar_lea.vmem %s1, %s271
      $region48: #{end2end_encoder_forward.1} parent=39 // pred_fallthru
        _
    $region40: #{end2end_encoder_forward.1} parent=5 // pred_fallthru
      _
    %p273 = scmp.le.s32.totalorder 1, %s16
    %p274 = scmp.lt.s32.totalorder %s16, 3
    %p275 = pnand %p273, %p274
    %p276 = pneg %p275
    // Predicated region
    $region49: #{end2end_encoder_forward.1} parent=5 // pred_check
      _
    $region50: #{end2end_encoder_forward.1} parent=5 // pred_check_branch
      %278 = sbr.rel (%p275) target = $region52
    $region51: #{end2end_encoder_forward.1} parent=5 // pred_region
      %s279 = ssub.s32 %s16, 1
      %p280 = scmp.lt.s32.totalorder %s21, 1
      %s281 = scalar_select %p280, %s21, 1
      %s282 = smul.addr %s281, 2
      %s283 = smul.addr %s282, 4
      %s284 = scalar_lea.vmem %s0, %s283
      %p285 = pneg %p42
      %p286 = pneg %p39
      %p287 = scmp.lt.s32.totalorder %s21, 1
      %s288 = scalar_select %p287, %s21, 1
      %s289 = smul.addr %s288, 2
      %s290 = smul.addr %s289, 4
      %s291 = scalar_lea.vmem %s1, %s290
      %p292 = pneg %p68
      %p293 = pneg %p65
      %p294 = pneg %p89
      %p295 = pneg %p86
      %p296 = pneg %p110
      %p297 = pneg %p107
      %p298 = pneg %p131
      %p299 = pneg %p128
      %p300 = pneg %p152
      %p301 = pneg %p149
      %p302 = pneg %p173
      %p303 = pneg %p170
      %p304 = pneg %p194
      %p305 = pneg %p191
      %p306 = pneg %p220
      %p307 = pneg %p217
      %p308 = scmp.lt.s32.totalorder %s21, 1
      %s309 = scalar_select %p308, %s21, 1
      %s310 = smul.addr %s309, 2
      %s311 = smul.addr %s310, 8
      %s312 = scalar_lea.vmem %s8, %s311
      %p313 = scmp.lt.s32.totalorder %s21, 1
      %s314 = scalar_select %p313, %s21, 1
      %s315 = smul.addr %s314, 2
      %s316 = smul.addr %s315, 4
      %s317 = scalar_lea.vmem %s0, %s316
      %p318 = scmp.lt.s32.totalorder %s21, 1
      %s319 = scalar_select %p318, %s21, 1
      %s320 = smul.addr %s319, 2
      %s321 = smul.addr %s320, 4
      %s322 = scalar_lea.vmem %s1, %s321
      %p323 = scmp.lt.s32.totalorder %s21, 1
      %s324 = scalar_select %p323, %s21, 1
      %s325 = smul.addr %s324, 2
      %s326 = smul.addr %s325, 8
      %s327 = scalar_lea.vmem %s8, %s326
      %v329 = vld [vmem:[%s317] sm:$0xf]
      %v330 = vld [vmem:[%s317 + $0x4] sm:$0xf]
      %v331 = vld [vmem:[%s322] sm:$0xf]
      %v332 = vld [vmem:[%s322 + $0x4] sm:$0x1]
      %v333 = vld [vmem:[%s2] sm:$0xf]
      %v334 = vld [vmem:[%s2 + $0x4] sm:$0xf]
      %v335 = vld [vmem:[%s2 + $0x8] sm:$0xf]
      %v336 = vld [vmem:[%s2 + $0xc] sm:$0xf]
      %v339 = vunpack.c.l.b16 %v329
      %v340 = vunpack.c.l.b16 %v330
      %v341 = vpack.c.b16 %v340, %v339
      %v346 = vunpack.c.l.b16 %v333
      %v347 = vunpack.c.l.b16 %v334
      %v348 = vunpack.c.l.b16 %v335
      %v349 = vunpack.c.l.b16 %v336
      %v350 = vpack.c.b16 %v347, %v346
      %v351 = vpack.c.b16 %v349, %v348
      %vm354 = vcmask 261120
      %v356 = vsel %vm354, %v341, 0
      %358 = vmatprep.subr.bf16.mxu0 0
      %359 = vmatpush1.bf16.msra.mxu0 %v350
      %360 = vmatprep.subr.bf16.mxu0 0
      %361 = vmatpush1.bf16.msra.mxu0 %v351
      %362 = vmatprep.subr.bf16.mxu0 0
      %363 = vmatpush1.bf16.msra.mxu0 0
      %364 = vmatprep.subr.bf16.mxu0 0
      %365 = vmatpush1.bf16.msra.mxu0 0
      %366 = vmatprep.subr.bf16.mxu0 0
      %367 = vmatpush1.bf16.msra.mxu0 0
      %368 = vmatprep.subr.bf16.mxu0 0
      %369 = vmatpush1.bf16.msra.mxu0 0
      %370 = vmatprep.subr.bf16.mxu0 0
      %371 = vmatpush1.bf16.msra.mxu0 0
      %372 = vmatprep.subr.bf16.mxu0 0
      %373 = vmatpush1.bf16.msra.mxu0 0
      %374 = vmatprep.subr.bf16.mxu0 0
      %375 = vmatpush1.bf16.msra.mxu0 0
      %376 = vmatprep.subr.bf16.mxu0 0
      %377 = vmatpush1.bf16.msra.mxu0 0
      %378 = vmatprep.subr.bf16.mxu0 0
      %379 = vmatpush1.bf16.msra.mxu0 0
      %380 = vmatprep.subr.bf16.mxu0 0
      %381 = vmatpush1.bf16.msra.mxu0 0
      %382 = vmatprep.subr.bf16.mxu0 0
      %383 = vmatpush1.bf16.msra.mxu0 0
      %384 = vmatprep.subr.bf16.mxu0 0
      %385 = vmatpush1.bf16.msra.mxu0 0
      %386 = vmatprep.subr.bf16.mxu0 0
      %387 = vmatpush1.bf16.msra.mxu0 0
      %388 = vmatprep.subr.bf16.mxu0 0
      %389 = vmatpush1.bf16.msra.mxu0 0
      %390 = vmatprep.mubr.bf16.mxu0 0
      %391 = vmatmul.mubr.bf16.gmra.mrb[0].mxu0 %v356
      %v392 = vpop.f32.mrb[0].mxu0
      %v393 = vadd.f32 0.0, %v392
      %v394 = vpop.f32.mrb[0].mxu0
      %v395 = vpop.f32.mrb[0].mxu0
      %v396 = vadd.f32 0.0, %v395
      %v397 = vpop.f32.mrb[0].mxu0
      %398 = vdwg.mxu0
      %v399 = vpack.c.bf16 %v396, %v393
      %v400 = vld [vmem:[%s3] sm:$0x1]
      %v402 = vlaneseq
      %v403 = vshrl.u32 %v402, 7
      %v404 = vsub.s32 0, %v403
      %v405 = vrot.slane %v400, %v404
      %v409 = vunpack.c.l.b16 %v331
      %v410 = vunpack.c.l.b16 %v332
      %v411 = vpack.c.b16 %v410, %v409
      %vm412 = vcmask 130048
      %v414 = vsel %vm412, %v411, 0
      %416 = vmatprep.subr.bf16.mxu0 0
      %417 = vmatpush1.bf16.msra.mxu0 %v399
      %418 = vmatprep.subr.bf16.mxu0 0
      %419 = vmatpush1.bf16.msra.mxu0 0
      %420 = vmatprep.subr.bf16.mxu0 0
      %421 = vmatpush1.bf16.msra.mxu0 0
      %422 = vmatprep.subr.bf16.mxu0 0
      %423 = vmatpush1.bf16.msra.mxu0 0
      %424 = vmatprep.subr.bf16.mxu0 0
      %425 = vmatpush1.bf16.msra.mxu0 0
      %426 = vmatprep.subr.bf16.mxu0 0
      %427 = vmatpush1.bf16.msra.mxu0 0
      %428 = vmatprep.subr.bf16.mxu0 0
      %429 = vmatpush1.bf16.msra.mxu0 0
      %430 = vmatprep.subr.bf16.mxu0 0
      %431 = vmatpush1.bf16.msra.mxu0 0
      %432 = vmatprep.subr.bf16.mxu0 0
      %433 = vmatpush1.bf16.msra.mxu0 0
      %434 = vmatprep.subr.bf16.mxu0 0
      %435 = vmatpush1.bf16.msra.mxu0 0
      %436 = vmatprep.subr.bf16.mxu0 0
      %437 = vmatpush1.bf16.msra.mxu0 0
      %438 = vmatprep.subr.bf16.mxu0 0
      %439 = vmatpush1.bf16.msra.mxu0 0
      %440 = vmatprep.subr.bf16.mxu0 0
      %441 = vmatpush1.bf16.msra.mxu0 0
      %442 = vmatprep.subr.bf16.mxu0 0
      %443 = vmatpush1.bf16.msra.mxu0 0
      %444 = vmatprep.subr.bf16.mxu0 0
      %445 = vmatpush1.bf16.msra.mxu0 0
      %446 = vmatprep.subr.bf16.mxu0 0
      %447 = vmatpush1.bf16.msra.mxu0 0
      %448 = vmatprep.mubr.bf16.mxu0 0
      %449 = vmatmul.mubr.bf16.gmra.mrb[0].mxu0 %v414
      %v450 = vpop.f32.mrb[0].mxu0
      %v451 = vadd.f32 %v405, %v450
      %v452 = vpop.f32.mrb[0].mxu0
      %v453 = vpop.f32.mrb[0].mxu0
      %v454 = vadd.f32 %v405, %v453
      %v455 = vpop.f32.mrb[0].mxu0
      %456 = vdwg.mxu0
      %v457 = vmax.f32 %v451, 0.0
      %v458 = vmax.f32 %v454, 0.0
      %v459 = vpack.c.bf16 %v458, %v457
      %v460 = vld [vmem:[%s4] sm:$0xf]
      %v461 = vld [vmem:[%s4 + $0x4] sm:$0xf]
      %v462 = vld [vmem:[%s4 + $0x8] sm:$0xf]
      %v463 = vld [vmem:[%s4 + $0xc] sm:$0xf]
      %v464 = vld [vmem:[%s5] sm:$0x1]
      %v466 = vlaneseq
      %v467 = vshrl.u32 %v466, 7
      %v468 = vsub.s32 0, %v467
      %v469 = vrot.slane %v464, %v468
      %v475 = vunpack.c.l.b16 %v460
      %v476 = vunpack.c.l.b16 %v461
      %v477 = vunpack.c.l.b16 %v462
      %v478 = vunpack.c.l.b16 %v463
      %v479 = vpack.c.b16 %v476, %v475
      %v480 = vpack.c.b16 %v478, %v477
      %v484 = vsel %vm354, %v459, 0
      %486 = vmatprep.subr.bf16.mxu0 0
      %487 = vmatpush1.bf16.msra.mxu0 %v479
      %488 = vmatprep.subr.bf16.mxu0 0
      %489 = vmatpush1.bf16.msra.mxu0 %v480
      %490 = vmatprep.subr.bf16.mxu0 0
      %491 = vmatpush1.bf16.msra.mxu0 0
      %492 = vmatprep.subr.bf16.mxu0 0
      %493 = vmatpush1.bf16.msra.mxu0 0
      %494 = vmatprep.subr.bf16.mxu0 0
      %495 = vmatpush1.bf16.msra.mxu0 0
      %496 = vmatprep.subr.bf16.mxu0 0
      %497 = vmatpush1.bf16.msra.mxu0 0
      %498 = vmatprep.subr.bf16.mxu0 0
      %499 = vmatpush1.bf16.msra.mxu0 0
      %500 = vmatprep.subr.bf16.mxu0 0
      %501 = vmatpush1.bf16.msra.mxu0 0
      %502 = vmatprep.subr.bf16.mxu0 0
      %503 = vmatpush1.bf16.msra.mxu0 0
      %504 = vmatprep.subr.bf16.mxu0 0
      %505 = vmatpush1.bf16.msra.mxu0 0
      %506 = vmatprep.subr.bf16.mxu0 0
      %507 = vmatpush1.bf16.msra.mxu0 0
      %508 = vmatprep.subr.bf16.mxu0 0
      %509 = vmatpush1.bf16.msra.mxu0 0
      %510 = vmatprep.subr.bf16.mxu0 0
      %511 = vmatpush1.bf16.msra.mxu0 0
      %512 = vmatprep.subr.bf16.mxu0 0
      %513 = vmatpush1.bf16.msra.mxu0 0
      %514 = vmatprep.subr.bf16.mxu0 0
      %515 = vmatpush1.bf16.msra.mxu0 0
      %516 = vmatprep.subr.bf16.mxu0 0
      %517 = vmatpush1.bf16.msra.mxu0 0
      %518 = vmatprep.mubr.bf16.mxu0 0
      %519 = vmatmul.mubr.bf16.gmra.mrb[0].mxu0 %v484
      %v520 = vpop.f32.mrb[0].mxu0
      %v521 = vadd.f32 %v469, %v520
      %v522 = vpop.f32.mrb[0].mxu0
      %v523 = vpop.f32.mrb[0].mxu0
      %v524 = vadd.f32 %v469, %v523
      %v525 = vpop.f32.mrb[0].mxu0
      %526 = vdwg.mxu0
      %vm527 = vcmp.gt.f32.partialorder %v521, 0.0
      %vm528 = vcmp.gt.f32.partialorder %v524, 0.0
      %v529 = vmul.f32 %v521, 0.01
      %v530 = vmul.f32 %v524, 0.01
      %v531 = vsel %vm527, %v521, %v529
      %v532 = vsel %vm528, %v524, %v530
      %v533 = vld [vmem:[%s6] sm:$0xff]
      %v534 = vld [vmem:[%s6 + $0x8] sm:$0xff]
      %v535 = vld [vmem:[%s6 + $0x10] sm:$0xff]
      %v536 = vld [vmem:[%s6 + $0x18] sm:$0xff]
      %v537 = vld [vmem:[#allocation2] sm:$0x1]
      %v539 = vlaneseq
      %v540 = vshrl.u32 %v539, 7
      %v541 = vsub.s32 0, %v540
      %v542 = vrot.slane %v537, %v541
      %v545 = vsel %vm354, %v531, 0
      %v548 = vsel %vm354, %v532, 0
      %550 = vmatprep.subr.mxu0 0.0
      %551 = vmatpush1.msra.mxu0 %v533
      %552 = vmatprep.subr.mxu0 0.0
      %553 = vmatpush1.msra.mxu0 %v534
      %554 = vmatprep.subr.mxu0 0.0
      %555 = vmatpush1.msra.mxu0 %v535
      %556 = vmatprep.subr.mxu0 0.0
      %557 = vmatpush1.msra.mxu0 %v536
      %558 = vmatprep.subr.mxu0 0.0
      %559 = vmatpush1.msra.mxu0 0.0
      %560 = vmatprep.subr.mxu0 0.0
      %561 = vmatpush1.msra.mxu0 0.0
      %562 = vmatprep.subr.mxu0 0.0
      %563 = vmatpush1.msra.mxu0 0.0
      %564 = vmatprep.subr.mxu0 0.0
      %565 = vmatpush1.msra.mxu0 0.0
      %566 = vmatprep.subr.mxu0 0.0
      %567 = vmatpush1.msra.mxu0 0.0
      %568 = vmatprep.subr.mxu0 0.0
      %569 = vmatpush1.msra.mxu0 0.0
      %570 = vmatprep.subr.mxu0 0.0
      %571 = vmatpush1.msra.mxu0 0.0
      %572 = vmatprep.subr.mxu0 0.0
      %573 = vmatpush1.msra.mxu0 0.0
      %574 = vmatprep.subr.mxu0 0.0
      %575 = vmatpush1.msra.mxu0 0.0
      %576 = vmatprep.subr.mxu0 0.0
      %577 = vmatpush1.msra.mxu0 0.0
      %578 = vmatprep.subr.mxu0 0.0
      %579 = vmatpush1.msra.mxu0 0.0
      %580 = vmatprep.subr.mxu0 0.0
      %581 = vmatpush1.msra.mxu0 0.0
      %582 = vmatprep.subr.mxu0 0.0
      %583 = vmatpush1.msra.mxu0 0.0
      %584 = vmatprep.subr.mxu0 0.0
      %585 = vmatpush1.msra.mxu0 0.0
      %586 = vmatprep.subr.mxu0 0.0
      %587 = vmatpush1.msra.mxu0 0.0
      %588 = vmatprep.subr.mxu0 0.0
      %589 = vmatpush1.msra.mxu0 0.0
      %590 = vmatprep.subr.mxu0 0.0
      %591 = vmatpush1.msra.mxu0 0.0
      %592 = vmatprep.subr.mxu0 0.0
      %593 = vmatpush1.msra.mxu0 0.0
      %594 = vmatprep.subr.mxu0 0.0
      %595 = vmatpush1.msra.mxu0 0.0
      %596 = vmatprep.subr.mxu0 0.0
      %597 = vmatpush1.msra.mxu0 0.0
      %598 = vmatprep.subr.mxu0 0.0
      %599 = vmatpush1.msra.mxu0 0.0
      %600 = vmatprep.subr.mxu0 0.0
      %601 = vmatpush1.msra.mxu0 0.0
      %602 = vmatprep.subr.mxu0 0.0
      %603 = vmatpush1.msra.mxu0 0.0
      %604 = vmatprep.subr.mxu0 0.0
      %605 = vmatpush1.msra.mxu0 0.0
      %606 = vmatprep.subr.mxu0 0.0
      %607 = vmatpush1.msra.mxu0 0.0
      %608 = vmatprep.subr.mxu0 0.0
      %609 = vmatpush1.msra.mxu0 0.0
      %610 = vmatprep.subr.mxu0 0.0
      %611 = vmatpush1.msra.mxu0 0.0
      %612 = vmatprep.subr.mxu0 0.0
      %613 = vmatpush1.msra.mxu0 0.0
      %614 = vmatprep.mubr.f32.mxu0 0.0
      %615 = vmatmul.mubr.f32.gmra.mrb[0].mxu0 %v545
      %v616 = vpop.f32.mrb[0].mxu0
      %v617 = vadd.f32 %v542, %v616
      %v618 = vpop.f32.mrb[0].mxu0
      %619 = vmatprep.mubr.f32.mxu0 0.0
      %620 = vmatmul.mubr.f32.gmra.mrb[0].mxu0 %v548
      %v621 = vpop.f32.mrb[0].mxu0
      %v622 = vadd.f32 %v542, %v621
      %v623 = vpop.f32.mrb[0].mxu0
      %624 = vdwg.mxu0
      %vm625 = vcmask 7168
      %626 = vst.msk [vmem:[%s327] sm:$0xff] %vm625, %v617
      %vm627 = vcmask 1024
      %628 = vst.msk [vmem:[%s327 + $0x8] sm:$0x3] %vm627, %v622
      %p629 = scmp.lt.s32.totalorder %s21, 1
      %s630 = scalar_select %p629, %s21, 1
      %s631 = smul.addr %s630, 2
      %s632 = smul.addr %s631, 8
      %s633 = scalar_lea.vmem %s8, %s632
      // Predicated region
      $region53: #{end2end_encoder_forward.1} parent=51 // pred_check
        %p634 = pneg %p217
      $region54: #{end2end_encoder_forward.1} parent=51 // pred_check_branch
        %636 = sbr.rel (%p634) target = $region56
      $region55: #{end2end_encoder_forward.1} parent=51 // pred_region
        _
      $region56: #{end2end_encoder_forward.1} parent=51 // pred_fallthru
        _
    $region52: #{end2end_encoder_forward.1} parent=5 // pred_fallthru
      _
    %p637 = scmp.le.s32.totalorder 2, %s16
    // Predicated region
    $region57: #{end2end_encoder_forward.1} parent=5 // pred_check
      %p638 = pneg %p637
    $region58: #{end2end_encoder_forward.1} parent=5 // pred_check_branch
      %640 = sbr.rel (%p638) target = $region60
    $region59: #{end2end_encoder_forward.1} parent=5 // pred_region
      %s641 = ssub.s32 %s16, 2
      // Predicated region
      $region61: #{end2end_encoder_forward.1} parent=59 // pred_check
        %p642 = pneg %p223
      $region62: #{end2end_encoder_forward.1} parent=59 // pred_check_branch
        %644 = sbr.rel (%p642) target = $region64
      $region63: #{end2end_encoder_forward.1} parent=59 // pred_region
        %p645 = scmp.lt.s32.totalorder %s22, 1
        %s646 = scalar_select %p645, %s22, 1
        %s647 = smul.addr %s646, 2
        %s648 = smul.addr %s647, 8
        %s649 = scalar_lea.vmem %s8, %s648
      $region64: #{end2end_encoder_forward.1} parent=59 // pred_fallthru
        _
    $region60: #{end2end_encoder_forward.1} parent=5 // pred_fallthru
      _
  $region6: #{end2end_encoder_forward.1} parent=0 // loop_footer
    %s20 = sadd.s32 1, %s16
  $region7: #{end2end_encoder_forward.1} parent=0 // loop_footer_branch
    %15 = sbr.rel target = $region3
  $region8: #{end2end_encoder_forward.1} parent=0 // loop_exit
    _

</llo_original>
